<compile_context>
chip_gen: v5e
topology: v5e:2x2
jax: 0.10.0
libtpu: 0.0.40
codegen_flags: <defaults>
</compile_context>

<pallas_src>
import functools

import jax
import jax.numpy as jnp
from jax.experimental import pallas as pl
from jax.experimental.pallas import tpu as pltpu

_NEG = -1.0e30                       # "minus infinity" without inf arithmetic
_I32_MIN = -(2 ** 31)
_PAD_LABEL_COL = _I32_MIN            # sentinel label for padded contrast columns
_PAD_LABEL_ROW = _I32_MIN + 1        # sentinel label for padded anchor rows
_VMEM_BUDGET = 44 * 1024 * 1024      # keep tiles inside v7x's 64 MiB VMEM


def _round_up(x, m):
    return ((x + m - 1) // m) * m


def _vmem_estimate(tm, tn, d_p, feat_bytes):
    feat = 2 * (tm + tn) * d_p * feat_bytes      # double-buffered feature tiles
    small = 2 * (tm * 128 + 2 * 8 * tn) * 4      # label / column-bias tiles
    scratch = tm * tn * 4 + 4 * tm * 128 * 4     # ldiff table + per-row accums
    interm = 6 * tm * tn * 4                     # [tm, tn] f32 temporaries
    out = 2 * tm * 128 * 4
    return feat + small + scratch + interm + out


def _supcon_kernel(a_ref, alab_ref, c_ref, clab_ref, cbias_ref, out_ref,
                   ldiff_sc, m_sc, d_sc, s_sc, p_sc, *,
                   loss_scale, n_a, tm, tn, has_col_pad):
    i = pl.program_id(0)          # row (anchor) tile
    j = pl.program_id(1)          # column (contrast) tile -- online LSE axis

    @pl.when(j == 0)
    def _():
        # (local_row - local_col) table, built once per row tile; the global
        # diagonal inside tile (i, j) is where this table equals j*tn - i*tm.
        ldiff_sc[...] = (jax.lax.broadcasted_iota(jnp.int32, (tm, tn), 0)
                         - jax.lax.broadcasted_iota(jnp.int32, (tm, tn), 1))
        m_sc[...] = jnp.full((tm, 1), _NEG, jnp.float32)
        d_sc[...] = jnp.zeros((tm, 1), jnp.float32)
        s_sc[...] = jnp.zeros((tm, 1), jnp.float32)
        p_sc[...] = jnp.zeros((tm, 1), jnp.float32)

    # Anchor already carries 1/temperature and is in the MXU compute dtype
    # (folded + cast once in the wrapper): no per-step scale / cast.
    logits = jax.lax.dot_general(
        a_ref[...], c_ref[...],
        dimension_numbers=(((1,), (1,)), ((), ())),
        preferred_element_type=jnp.float32)                    # [tm, tn] f32

    if has_col_pad:                                            # trace-time switch
        logits = logits + cbias_ref[...]                       # -1e30 on padded cols

    # logits_mask: zero (here -inf) the (r, r) diagonal, as in the torch scatter.
    not_diag = ldiff_sc[...] != (j * tn - i * tm)
    logits = jnp.where(not_diag, logits, _NEG)

    # Online (flash-style) log-sum-exp recurrence over column tiles.
    m_old = m_sc[...]
    m_new = jnp.maximum(m_old, jnp.max(logits, axis=1, keepdims=True))
    alpha = jnp.exp(m_old - m_new)
    e = jnp.exp(logits - m_new)                                # masked cols -> 0
    d_sc[...] = d_sc[...] * alpha + jnp.sum(e, axis=1, keepdims=True)

    # Positive mask from label equality (padded columns carry a sentinel label,
    # so no per-step column-bound compare is needed).
    pos = jnp.logical_and(alab_ref[...] == clab_ref[...], not_diag)
    s_sc[...] += jnp.sum(jnp.where(pos, logits, 0.0), axis=1, keepdims=True)
    p_sc[...] += jnp.sum(jnp.where(pos, 1.0, 0.0), axis=1, keepdims=True)
    m_sc[...] = m_new

    @pl.when(j == pl.num_programs(1) - 1)
    def _():
        p = p_sc[...]
        lse = jnp.log(d_sc[...]) + m_sc[...]
        # NOTE: rows with zero positives give NaN (0/0), matching the torch code.
        mean_lpp = (s_sc[...] - p * lse) / p
        loss_rows = loss_scale * mean_lpp
        row_idx = i * tm + jax.lax.broadcasted_iota(jnp.int32, (tm, 1), 0)
        out_ref[...] = jnp.where(row_idx < n_a, loss_rows, 0.0)


def _run_kernel(anchor, a_lab, contrast, c_lab, temperature, base_temperature,
                tm_target=512, tn_target=512, compute_dtype=jnp.bfloat16):
    n_a, d = anchor.shape
    n_c = contrast.shape[0]
    feat_bytes = jnp.dtype(compute_dtype).itemsize
    row_align = 16 if feat_bytes == 2 else 8

    d_p = _round_up(d, 128)                       # lane-dense contraction dim
    tm = min(tm_target, _round_up(n_a, row_align))
    tn = min(tn_target, _round_up(n_c, 128))

    # Shrink tiles into the v7x-safe VMEM budget (64 MiB physical / 32 MiB default).
    while _vmem_estimate(tm, tn, d_p, feat_bytes) > _VMEM_BUDGET and tn > 128:
        tn = max(128, _round_up(tn // 2, 128))
    while _vmem_estimate(tm, tn, d_p, feat_bytes) > _VMEM_BUDGET and tm > row_align:
        tm = max(row_align, _round_up(tm // 2, row_align))

    # Give the "parallel" row axis >= 2 tiles so both v7x TensorCores get work.
    if _round_up(n_a, tm) == tm and tm >= 2 * row_align:
        tm = _round_up((n_a + 1) // 2, row_align)

    n_a_p = _round_up(n_a, tm)
    n_c_p = _round_up(n_c, tn)
    has_col_pad = n_c_p != n_c

    inv_temp = 1.0 / float(temperature)
    # Fold 1/T into the small anchor slab once (fused with the pad/cast pass).
    anchor_p = jnp.pad(anchor.astype(jnp.float32) * inv_temp,
                       ((0, n_a_p - n_a), (0, d_p - d))).astype(compute_dtype)
    contrast_p = jnp.pad(contrast.astype(jnp.float32),
                         ((0, n_c_p - n_c), (0, d_p - d))).astype(compute_dtype)
    # TODO(synk): labels equal to INT32_MIN / INT32_MIN+1 would collide with the
    # padding sentinels; real label ids never use those values.
    a_lab_p = jnp.pad(a_lab.astype(jnp.int32), (0, n_a_p - n_a),
                      constant_values=_PAD_LABEL_ROW).reshape(n_a_p, 1)
    c_lab_p = jnp.pad(c_lab.astype(jnp.int32), (0, n_c_p - n_c),
                      constant_values=_PAD_LABEL_COL).reshape(1, n_c_p)
    col_bias = jnp.where(jnp.arange(n_c_p) < n_c, 0.0, _NEG
                         ).astype(jnp.float32).reshape(1, n_c_p)

    grid = (n_a_p // tm, n_c_p // tn)
    kernel = functools.partial(
        _supcon_kernel,
        loss_scale=-(float(temperature) / float(base_temperature)),
        n_a=n_a, tm=tm, tn=tn, has_col_pad=has_col_pad)

    vmem_limit = int(min(56 * 1024 * 1024,
                         max(16 * 1024 * 1024,
                             1.35 * _vmem_estimate(tm, tn, d_p, feat_bytes))))

    per_row = pl.pallas_call(
        kernel,
        out_shape=jax.ShapeDtypeStruct((n_a_p, 1), jnp.float32),
        grid_spec=pltpu.PrefetchScalarGridSpec(
            num_scalar_prefetch=0,
            grid=grid,
            in_specs=[
                pl.BlockSpec((tm, d_p), lambda i, j: (i, 0)),   # anchor tile (resident over j)
                pl.BlockSpec((tm, 1),   lambda i, j: (i, 0)),   # anchor labels
                pl.BlockSpec((tn, d_p), lambda i, j: (j, 0)),   # contrast tile
                pl.BlockSpec((1, tn),   lambda i, j: (0, j)),   # contrast labels
                pl.BlockSpec((1, tn),   lambda i, j: (0, j)),   # column padding bias
            ],
            out_specs=pl.BlockSpec((tm, 1), lambda i, j: (i, 0)),
            scratch_shapes=[pltpu.VMEM((tm, tn), jnp.int32)]    # row-col diff table
                          + [pltpu.VMEM((tm, 1), jnp.float32)] * 4,
        ),
        compiler_params=pltpu.CompilerParams(
            dimension_semantics=("parallel", "arbitrary"),
            vmem_limit_bytes=vmem_limit),
    )(anchor_p, a_lab_p, contrast_p, c_lab_p, col_bias)

    # Padded anchor rows were zeroed in-kernel; mean over the real anchors.
    # (Output writeback is one tiny (tm,1) block per row tile, so a lane-dense
    #  out layout would not change the roofline here.)
    return jnp.sum(per_row) / n_a


def supcon_loss_with_membank(features, labels=None, mask=None,
                             mfeatures=None, mlabels=None,
                             temperature=0.07, contrast_mode='all',
                             base_temperature=0.07,
                             compute_dtype=jnp.bfloat16):
    """JAX/Pallas equivalent of SupConLossWithMembank.forward."""
    if features.ndim < 3:
        raise ValueError('`features` needs to be [bsz, n_views, ...]')
    B, V = features.shape[0], features.shape[1]
    features = features.reshape(B, V, -1).astype(jnp.float32)
    D = features.shape[-1]

    if labels is not None and mask is not None:
        raise ValueError('Cannot define both `labels` and `mask`')
    elif labels is None and mask is None:
        base_labels = jnp.arange(B, dtype=jnp.int32)   # eye(B) == arange equality
    elif labels is not None:
        base_labels = labels.reshape(-1).astype(jnp.int32)
        if base_labels.shape[0] != B:
            raise ValueError('Num of labels does not match num of features')
    else:
        # TODO(synk): arbitrary user-supplied `mask` (possibly asymmetric) cannot
        # be regenerated from labels in-kernel; labels / eye / membank paths are covered.
        raise NotImplementedError(
            'explicit `mask` argument not supported by the Pallas path')

    contrast_count = V
    # torch.cat(torch.unbind(features, dim=1), dim=0) == transpose + reshape
    contrast_feature = jnp.transpose(features, (1, 0, 2)).reshape(V * B, D)
    contrast_labels = jnp.tile(base_labels, contrast_count)

    if contrast_mode == 'one':
        anchor_feature = features[:, 0]
        anchor_count = 1
    elif contrast_mode == 'all':
        anchor_feature = contrast_feature
        anchor_count = contrast_count
    else:
        raise ValueError(f'Unknown mode: {contrast_mode}')
    anchor_labels = jnp.tile(base_labels, anchor_count)

    if mfeatures is not None and mlabels is not None:
        if labels is None:
            raise ValueError('membank path requires `labels`')
        mfeatures = mfeatures.reshape(B, V, -1).astype(jnp.float32)
        contrast_feature = jnp.transpose(mfeatures, (1, 0, 2)).reshape(V * B, D)
        contrast_labels = jnp.tile(mlabels.reshape(-1).astype(jnp.int32),
                                   contrast_count)

    return _run_kernel(anchor_feature, anchor_labels,
                       contrast_feature, contrast_labels,
                       temperature, base_temperature,
                       compute_dtype=compute_dtype)


def _reference_loss(features, labels, mfeatures=None, mlabels=None,
                    temperature=0.07, base_temperature=0.07,
                    contrast_mode='all'):
    """Pure-JAX reference replicating the torch forward."""
    B, V, D = features.shape
    cf = jnp.transpose(features, (1, 0, 2)).reshape(V * B, D)
    if contrast_mode == 'one':
        af = features[:, 0]
        anchor_count = 1
    else:
        af = cf
        anchor_count = V
    if mfeatures is not None:
        cf = jnp.transpose(mfeatures, (1, 0, 2)).reshape(V * B, D)
        base = (labels[:, None] == mlabels[None, :]).astype(jnp.float32)
    else:
        base = (labels[:, None] == labels[None, :]).astype(jnp.float32)
    adc = (af @ cf.T) / temperature
    logits = adc - jnp.max(adc, axis=1, keepdims=True)
    mask = jnp.tile(base, (anchor_count, V))
    n_a, n_c = mask.shape
    logits_mask = (jnp.arange(n_a)[:, None] != jnp.arange(n_c)[None, :]
                   ).astype(jnp.float32)
    mask = mask * logits_mask
    exp_logits = jnp.exp(logits) * logits_mask
    log_prob = logits - jnp.log(jnp.sum(exp_logits, axis=1, keepdims=True))
    mlpp = jnp.sum(mask * log_prob, axis=1) / jnp.sum(mask, axis=1)
    return jnp.mean(-(temperature / base_temperature) * mlpp)


if __name__ == "__main__":
    key = jax.random.PRNGKey(0)
    k_feat, k_lab, k_mfeat = jax.random.split(key, 3)

    B, V, D = 8, 2, 32
    features = jax.random.normal(k_feat, (B, V, D), dtype=jnp.float32)
    features = features / jnp.linalg.norm(features, axis=-1, keepdims=True)
    labels = jax.random.randint(k_lab, (B,), 0, 3)

    ref = _reference_loss(features, labels)

    # f32 MXU path: tight check of the kernel math against the pure-JAX reference.
    loss32 = jax.block_until_ready(
        supcon_loss_with_membank(features, labels=labels,
                                 compute_dtype=jnp.float32))
    assert jnp.allclose(loss32, ref, atol=1e-4, rtol=1e-4), (loss32, ref)

    # Default bf16 MXU path (looser tolerance for bf16 operand rounding).
    loss = jax.block_until_ready(supcon_loss_with_membank(features, labels=labels))
    assert jnp.allclose(loss, ref, atol=5e-2, rtol=5e-2), (loss, ref)

    # Unsupervised SimCLR path (labels=None -> eye mask).
    loss_u = jax.block_until_ready(supcon_loss_with_membank(features))
    ref_u = _reference_loss(features, jnp.arange(B))
    assert jnp.allclose(loss_u, ref_u, atol=5e-2, rtol=5e-2), (loss_u, ref_u)

    # Memory-bank path (contrast features/labels from the membank).
    mfeatures = jax.random.normal(k_mfeat, (B, V, D), dtype=jnp.float32)
    mfeatures = mfeatures / jnp.linalg.norm(mfeatures, axis=-1, keepdims=True)
    mlabels = jnp.roll(labels, 1)
    loss_m = jax.block_until_ready(
        supcon_loss_with_membank(features, labels=labels,
                                 mfeatures=mfeatures, mlabels=mlabels))
    ref_m = _reference_loss(features, labels, mfeatures=mfeatures, mlabels=mlabels)
    assert jnp.allclose(loss_m, ref_m, atol=5e-2, rtol=5e-2), (loss_m, ref_m)

    print("KERNEL_OK")
</pallas_src>

<mosaic_0001>
module attributes {stable_mosaic.version = 11 : i64} {
  func.func @_supcon_kernel(%arg0: i32, %arg1: i32, %arg2: memref<8x128xf32, #tpu.memory_space<vmem>>, %arg3: memref<8x1xi32, #tpu.memory_space<vmem>>, %arg4: memref<128x128xf32, #tpu.memory_space<vmem>>, %arg5: memref<1x128xi32, #tpu.memory_space<vmem>>, %arg6: memref<1x128xf32, #tpu.memory_space<vmem>>, %arg7: memref<8x1xf32, #tpu.memory_space<vmem>>, %arg8: memref<8x128xi32, #tpu.memory_space<vmem>>, %arg9: memref<8x1xf32, #tpu.memory_space<vmem>>, %arg10: memref<8x1xf32, #tpu.memory_space<vmem>>, %arg11: memref<8x1xf32, #tpu.memory_space<vmem>>, %arg12: memref<8x1xf32, #tpu.memory_space<vmem>>) attributes {dimension_semantics = [#tpu.dimension_semantics<parallel>, #tpu.dimension_semantics<arbitrary>], iteration_bounds = array<i64: 2, 1>, scalar_prefetch = 0 : i64, scratch_operands = 5 : i64, tpu.core_type = #tpu.core_type<tc>, window_params = [{transform_indices = @transform_0, window_bounds = array<i64: 8, 128>}, {transform_indices = @transform_1, window_bounds = array<i64: 8, 1>}, {transform_indices = @transform_2, window_bounds = array<i64: 128, 128>}, {transform_indices = @transform_3, window_bounds = array<i64: 1, 128>}, {transform_indices = @transform_4, window_bounds = array<i64: 1, 128>}, {transform_indices = @transform_5, window_bounds = array<i64: 8, 1>}]} {
    %c0_i32 = arith.constant 0 : i32
    %0 = arith.cmpi eq, %arg1, %c0_i32 : i32
    %1 = arith.extui %0 : i1 to i32
    %c0_i32_0 = arith.constant 0 : i32
    %2 = arith.cmpi ne, %1, %c0_i32_0 : i32
    scf.if %2 {
      %57 = tpu.iota {dimensions = array<i32: 0>} : vector<8x128xi32>
      %58 = tpu.iota {dimensions = array<i32: 1>} : vector<8x128xi32>
      %59 = arith.subi %57, %58 : vector<8x128xi32>
      %c0_38 = arith.constant 0 : index
      %c0_39 = arith.constant 0 : index
      %60 = vector.load %arg8[%c0_38, %c0_39] : memref<8x128xi32, #tpu.memory_space<vmem>>, vector<8x128xi32>
      tpu.vector_store %arg8[%c0_38, %c0_39], %59 {strides = array<i32>} : memref<8x128xi32, #tpu.memory_space<vmem>>, vector<8x128xi32>,
      %cst_40 = arith.constant -1.000000e+30 : f32
      %61 = vector.broadcast %cst_40 : f32 to vector<8x1xf32>
      %c0_41 = arith.constant 0 : index
      %c0_42 = arith.constant 0 : index
      %62 = vector.load %arg9[%c0_41, %c0_42] : memref<8x1xf32, #tpu.memory_space<vmem>>, vector<8x1xf32>
      tpu.vector_store %arg9[%c0_41, %c0_42], %61 {strides = array<i32>} : memref<8x1xf32, #tpu.memory_space<vmem>>, vector<8x1xf32>,
      %cst_43 = arith.constant 0.000000e+00 : f32
      %63 = vector.broadcast %cst_43 : f32 to vector<8x1xf32>
      %c0_44 = arith.constant 0 : index
      %c0_45 = arith.constant 0 : index
      %64 = vector.load %arg10[%c0_44, %c0_45] : memref<8x1xf32, #tpu.memory_space<vmem>>, vector<8x1xf32>
      tpu.vector_store %arg10[%c0_44, %c0_45], %63 {strides = array<i32>} : memref<8x1xf32, #tpu.memory_space<vmem>>, vector<8x1xf32>,
      %cst_46 = arith.constant 0.000000e+00 : f32
      %65 = vector.broadcast %cst_46 : f32 to vector<8x1xf32>
      %c0_47 = arith.constant 0 : index
      %c0_48 = arith.constant 0 : index
      %66 = vector.load %arg11[%c0_47, %c0_48] : memref<8x1xf32, #tpu.memory_space<vmem>>, vector<8x1xf32>
      tpu.vector_store %arg11[%c0_47, %c0_48], %65 {strides = array<i32>} : memref<8x1xf32, #tpu.memory_space<vmem>>, vector<8x1xf32>,
      %cst_49 = arith.constant 0.000000e+00 : f32
      %67 = vector.broadcast %cst_49 : f32 to vector<8x1xf32>
      %c0_50 = arith.constant 0 : index
      %c0_51 = arith.constant 0 : index
      %68 = vector.load %arg12[%c0_50, %c0_51] : memref<8x1xf32, #tpu.memory_space<vmem>>, vector<8x1xf32>
      tpu.vector_store %arg12[%c0_50, %c0_51], %67 {strides = array<i32>} : memref<8x1xf32, #tpu.memory_space<vmem>>, vector<8x1xf32>,
    } else {
    }
    %c0 = arith.constant 0 : index
    %c0_1 = arith.constant 0 : index
    %3 = vector.load %arg2[%c0, %c0_1] : memref<8x128xf32, #tpu.memory_space<vmem>>, vector<8x128xf32>
    %c0_2 = arith.constant 0 : index
    %c0_3 = arith.constant 0 : index
    %4 = vector.load %arg4[%c0_2, %c0_3] : memref<128x128xf32, #tpu.memory_space<vmem>>, vector<128x128xf32>
    %cst = arith.constant dense<0.000000e+00> : vector<8x128xf32>
    %5 = tpu.matmul %3, %4, %cst {dimension_numbers = #tpu.dot_dimension_numbers<[1], [1], [0], [0], [0, 0, 1, 0], [], []>} : vector<8x128xf32>, vector<128x128xf32>, vector<8x128xf32> -> vector<8x128xf32>
    %c0_4 = arith.constant 0 : index
    %c0_5 = arith.constant 0 : index
    %6 = vector.load %arg6[%c0_4, %c0_5] : memref<1x128xf32, #tpu.memory_space<vmem>>, vector<1x128xf32>
    %7 = vector.broadcast %6 : vector<1x128xf32> to vector<8x128xf32>
    %8 = arith.addf %5, %7 : vector<8x128xf32>
    %c0_6 = arith.constant 0 : index
    %c0_7 = arith.constant 0 : index
    %9 = vector.load %arg8[%c0_6, %c0_7] : memref<8x128xi32, #tpu.memory_space<vmem>>, vector<8x128xi32>
    %c128_i32 = arith.constant 128 : i32
    %10 = arith.muli %arg1, %c128_i32 : i32
    %c8_i32 = arith.constant 8 : i32
    %11 = arith.muli %arg0, %c8_i32 : i32
    %12 = arith.subi %10, %11 : i32
    %13 = vector.broadcast %12 : i32 to vector<8x128xi32>
    %14 = arith.cmpi ne, %9, %13 : vector<8x128xi32>
    %cst_8 = arith.constant -1.000000e+30 : f32
    %15 = vector.broadcast %cst_8 : f32 to vector<8x128xf32>
    %16 = arith.select %14, %8, %15 : vector<8x128xi1>, vector<8x128xf32>
    %c0_9 = arith.constant 0 : index
    %c0_10 = arith.constant 0 : index
    %17 = vector.load %arg9[%c0_9, %c0_10] : memref<8x1xf32, #tpu.memory_space<vmem>>, vector<8x1xf32>
    %cst_11 = arith.constant dense<0xFF800000> : vector<8xf32>
    %18 = vector.multi_reduction <maximumf>, %16, %cst_11 [1] : vector<8x128xf32> to vector<8xf32>
    %19 = vector.shape_cast %18 : vector<8xf32> to vector<8x1xf32>
    %20 = arith.maximumf %17, %19 : vector<8x1xf32>
    %21 = arith.subf %17, %20 : vector<8x1xf32>
    %22 = math.exp %21 : vector<8x1xf32>
    %23 = vector.broadcast %20 : vector<8x1xf32> to vector<8x128xf32>
    %24 = arith.subf %16, %23 : vector<8x128xf32>
    %25 = math.exp %24 : vector<8x128xf32>
    %c0_12 = arith.constant 0 : index
    %c0_13 = arith.constant 0 : index
    %26 = vector.load %arg10[%c0_12, %c0_13] : memref<8x1xf32, #tpu.memory_space<vmem>>, vector<8x1xf32>
    %27 = arith.mulf %26, %22 : vector<8x1xf32>
    %cst_14 = arith.constant dense<0.000000e+00> : vector<8xf32>
    %28 = vector.multi_reduction <add>, %25, %cst_14 [1] : vector<8x128xf32> to vector<8xf32>
    %29 = vector.shape_cast %28 : vector<8xf32> to vector<8x1xf32>
    %30 = arith.addf %27, %29 : vector<8x1xf32>
    %c0_15 = arith.constant 0 : index
    %c0_16 = arith.constant 0 : index
    %31 = vector.load %arg10[%c0_15, %c0_16] : memref<8x1xf32, #tpu.memory_space<vmem>>, vector<8x1xf32>
    tpu.vector_store %arg10[%c0_15, %c0_16], %30 {strides = array<i32>} : memref<8x1xf32, #tpu.memory_space<vmem>>, vector<8x1xf32>,
    %c0_17 = arith.constant 0 : index
    %c0_18 = arith.constant 0 : index
    %32 = vector.load %arg3[%c0_17, %c0_18] : memref<8x1xi32, #tpu.memory_space<vmem>>, vector<8x1xi32>
    %c0_19 = arith.constant 0 : index
    %c0_20 = arith.constant 0 : index
    %33 = vector.load %arg5[%c0_19, %c0_20] : memref<1x128xi32, #tpu.memory_space<vmem>>, vector<1x128xi32>
    %34 = vector.broadcast %32 : vector<8x1xi32> to vector<8x128xi32>
    %35 = vector.broadcast %33 : vector<1x128xi32> to vector<8x128xi32>
    %36 = arith.cmpi eq, %34, %35 : vector<8x128xi32>
    %37 = arith.andi %36, %14 : vector<8x128xi1>
    %c0_21 = arith.constant 0 : index
    %c0_22 = arith.constant 0 : index
    %38 = vector.load %arg11[%c0_21, %c0_22] : memref<8x1xf32, #tpu.memory_space<vmem>>, vector<8x1xf32>
    %cst_23 = arith.constant 0.000000e+00 : f32
    %39 = vector.broadcast %cst_23 : f32 to vector<8x128xf32>
    %40 = arith.select %37, %16, %39 : vector<8x128xi1>, vector<8x128xf32>
    %cst_24 = arith.constant dense<0.000000e+00> : vector<8xf32>
    %41 = vector.multi_reduction <add>, %40, %cst_24 [1] : vector<8x128xf32> to vector<8xf32>
    %42 = vector.shape_cast %41 : vector<8xf32> to vector<8x1xf32>
    %43 = arith.addf %38, %42 : vector<8x1xf32>
    %c0_25 = arith.constant 0 : index
    %c0_26 = arith.constant 0 : index
    %44 = vector.load %arg11[%c0_25, %c0_26] : memref<8x1xf32, #tpu.memory_space<vmem>>, vector<8x1xf32>
    tpu.vector_store %arg11[%c0_25, %c0_26], %43 {strides = array<i32>} : memref<8x1xf32, #tpu.memory_space<vmem>>, vector<8x1xf32>,
    %c0_27 = arith.constant 0 : index
    %c0_28 = arith.constant 0 : index
    %45 = vector.load %arg12[%c0_27, %c0_28] : memref<8x1xf32, #tpu.memory_space<vmem>>, vector<8x1xf32>
    %cst_29 = arith.constant 1.000000e+00 : f32
    %cst_30 = arith.constant 0.000000e+00 : f32
    %46 = vector.broadcast %cst_29 : f32 to vector<8x128xf32>
    %47 = vector.broadcast %cst_30 : f32 to vector<8x128xf32>
    %48 = arith.select %37, %46, %47 : vector<8x128xi1>, vector<8x128xf32>
    %cst_31 = arith.constant dense<0.000000e+00> : vector<8xf32>
    %49 = vector.multi_reduction <add>, %48, %cst_31 [1] : vector<8x128xf32> to vector<8xf32>
    %50 = vector.shape_cast %49 : vector<8xf32> to vector<8x1xf32>
    %51 = arith.addf %45, %50 : vector<8x1xf32>
    %c0_32 = arith.constant 0 : index
    %c0_33 = arith.constant 0 : index
    %52 = vector.load %arg12[%c0_32, %c0_33] : memref<8x1xf32, #tpu.memory_space<vmem>>, vector<8x1xf32>
    tpu.vector_store %arg12[%c0_32, %c0_33], %51 {strides = array<i32>} : memref<8x1xf32, #tpu.memory_space<vmem>>, vector<8x1xf32>,
    %c0_34 = arith.constant 0 : index
    %c0_35 = arith.constant 0 : index
    %53 = vector.load %arg9[%c0_34, %c0_35] : memref<8x1xf32, #tpu.memory_space<vmem>>, vector<8x1xf32>
    tpu.vector_store %arg9[%c0_34, %c0_35], %20 {strides = array<i32>} : memref<8x1xf32, #tpu.memory_space<vmem>>, vector<8x1xf32>,
    %c0_i32_36 = arith.constant 0 : i32
    %54 = arith.cmpi eq, %arg1, %c0_i32_36 : i32
    %55 = arith.extui %54 : i1 to i32
    %c0_i32_37 = arith.constant 0 : i32
    %56 = arith.cmpi ne, %55, %c0_i32_37 : i32
    scf.if %56 {
      %c0_38 = arith.constant 0 : index
      %c0_39 = arith.constant 0 : index
      %57 = vector.load %arg12[%c0_38, %c0_39] : memref<8x1xf32, #tpu.memory_space<vmem>>, vector<8x1xf32>
      %c0_40 = arith.constant 0 : index
      %c0_41 = arith.constant 0 : index
      %58 = vector.load %arg10[%c0_40, %c0_41] : memref<8x1xf32, #tpu.memory_space<vmem>>, vector<8x1xf32>
      %59 = math.log %58 : vector<8x1xf32>
      %c0_42 = arith.constant 0 : index
      %c0_43 = arith.constant 0 : index
      %60 = vector.load %arg9[%c0_42, %c0_43] : memref<8x1xf32, #tpu.memory_space<vmem>>, vector<8x1xf32>
      %61 = arith.addf %59, %60 : vector<8x1xf32>
      %c0_44 = arith.constant 0 : index
      %c0_45 = arith.constant 0 : index
      %62 = vector.load %arg11[%c0_44, %c0_45] : memref<8x1xf32, #tpu.memory_space<vmem>>, vector<8x1xf32>
      %63 = arith.mulf %57, %61 : vector<8x1xf32>
      %64 = arith.subf %62, %63 : vector<8x1xf32>
      %65 = arith.divf %64, %57 : vector<8x1xf32>
      %cst_46 = arith.constant -1.000000e+00 : f32
      %66 = vector.broadcast %cst_46 : f32 to vector<8x1xf32>
      %67 = arith.mulf %66, %65 : vector<8x1xf32>
      %c8_i32_47 = arith.constant 8 : i32
      %68 = arith.muli %arg0, %c8_i32_47 : i32
      %69 = tpu.iota {dimensions = array<i32: 0>} : vector<8x1xi32>
      %70 = vector.broadcast %68 : i32 to vector<8x1xi32>
      %71 = arith.addi %70, %69 : vector<8x1xi32>
      %c16_i32 = arith.constant 16 : i32
      %72 = vector.broadcast %c16_i32 : i32 to vector<8x1xi32>
      %73 = arith.cmpi slt, %71, %72 : vector<8x1xi32>
      %cst_48 = arith.constant 0.000000e+00 : f32
      %74 = vector.broadcast %cst_48 : f32 to vector<8x1xf32>
      %75 = arith.select %73, %67, %74 : vector<8x1xi1>, vector<8x1xf32>
      %c0_49 = arith.constant 0 : index
      %c0_50 = arith.constant 0 : index
      %76 = vector.load %arg7[%c0_49, %c0_50] : memref<8x1xf32, #tpu.memory_space<vmem>>, vector<8x1xf32>
      tpu.vector_store %arg7[%c0_49, %c0_50], %75 {strides = array<i32>} : memref<8x1xf32, #tpu.memory_space<vmem>>, vector<8x1xf32>,
    } else {
    }
    return
  }
  func.func @transform_0(%arg0: i32, %arg1: i32) -> (i32, i32) {
    %c0_i32 = arith.constant 0 : i32
    %c0_i32_0 = arith.constant 0 : i32
    return %arg0, %c0_i32 : i32, i32
  }
  func.func @transform_1(%arg0: i32, %arg1: i32) -> (i32, i32) {
    %c0_i32 = arith.constant 0 : i32
    %c0_i32_0 = arith.constant 0 : i32
    return %arg0, %c0_i32 : i32, i32
  }
  func.func @transform_2(%arg0: i32, %arg1: i32) -> (i32, i32) {
    %c0_i32 = arith.constant 0 : i32
    %c0_i32_0 = arith.constant 0 : i32
    return %arg1, %c0_i32 : i32, i32
  }
  func.func @transform_3(%arg0: i32, %arg1: i32) -> (i32, i32) {
    %c0_i32 = arith.constant 0 : i32
    %c0_i32_0 = arith.constant 0 : i32
    return %c0_i32, %arg1 : i32, i32
  }
  func.func @transform_4(%arg0: i32, %arg1: i32) -> (i32, i32) {
    %c0_i32 = arith.constant 0 : i32
    %c0_i32_0 = arith.constant 0 : i32
    return %c0_i32, %arg1 : i32, i32
  }
  func.func @transform_5(%arg0: i32, %arg1: i32) -> (i32, i32) {
    %c0_i32 = arith.constant 0 : i32
    %c0_i32_0 = arith.constant 0 : i32
    return %arg0, %c0_i32 : i32, i32
  }
}

</mosaic_0001>

<llo_original>
// kernel: tpu_custom_call.1
$region0: #{tpu_custom_call.1}
  #allocation0 [shape = 'u32[]', space=smem, size = 0x4, offset = 0x4, fixed_abs, tag = 'smem constant byte address 0x4 - core index']
  #allocation1 [shape = 'u32[72,128]{1,0:T(1,128)}', space=vmem, size = 0x9000, scoped, tag = 'internal scratch']
  #allocation2 [shape = 's32[8,128]{1,0:T(8,128)}', space=vmem, size = 0x1000, scoped, tag = 'scratch operand']
  #allocation3 [shape = 'f32[8,1]{1,0:T(8,128)}', space=vmem, size = 0x1000, scoped, tag = 'scratch operand']
  #allocation4 [shape = 'f32[8,1]{1,0:T(8,128)}', space=vmem, size = 0x1000, scoped, tag = 'scratch operand']
  #allocation5 [shape = 'f32[8,1]{1,0:T(8,128)}', space=vmem, size = 0x1000, scoped, tag = 'scratch operand']
  #allocation6 [shape = 'f32[8,1]{1,0:T(8,128)}', space=vmem, size = 0x1000, scoped, tag = 'scratch operand']
  %s0 = inlined_call_operand.vmem [shape: f32[16,128], index: 0, kind: input, shape index: {}]
  %s1 = inlined_call_operand.vmem [shape: s32[16,1], index: 1, kind: input, shape index: {}]
  %s2 = inlined_call_operand.hbm [shape: f32[128,128], index: 2, kind: input, shape index: {}]
  %s3 = inlined_call_operand.vmem [shape: s32[1,128], index: 3, kind: input, shape index: {}]
  %s4 = inlined_call_operand.vmem [shape: f32[1,128], index: 4, kind: input, shape index: {}]
  %s5 = inlined_call_operand.vmem [shape: f32[16,1], index: 5, kind: output, shape index: {}]
  %s6 = sld [smem:[#allocation0]]
  $region65: #{tpu_custom_call.1} parent=0
    _
  %s8 = ssub.s32 1, %s6
  %s9 = scalar_select 0, %s8, %s6
  $region1: #{tpu_custom_call.1} parent=0
    #allocation7 [shape = 'u8[65536]{0}', space=vmem, size = 0x10000, scoped, tag = 'input window, operand 2, single buffered']
    #allocation8 [shape = 's32[2]{0}', space=sflag, size = 0x8, scoped, tag = 'scoped memory for tpu_custom_call.1']
    %10 = vsyncpa [#allocation8], 0
    loop: start=0, step=1, limit=4
    $region2: #{tpu_custom_call.1} parent=1 // loop_pre_header
      _
    $region3: #{tpu_custom_call.1} parent=1 // loop_header
      %s12 = sphi 0, %s16
      %p13 = scmp.ge.s32.totalorder %s12, 4
      %s19 = sphi 0, %s31
      %s20 = sphi 0, %s27
      %s21 = sphi 0, %s19
      %s22 = sphi 0, %s20
      %s23 = sphi 0, %s21
      %s24 = sphi 0, %s22
      %s34 = sphi 0, %s36
      %s37 = sphi 0, %s34
      %s38 = sphi 0, %s37
      %s54 = sphi 0, %s38
      %s60 = sphi 0, %s62
      %s63 = sphi 0, %s60
      %s64 = sphi 0, %s63
      %s80 = sphi 0, %s64
      %s86 = sphi 0, %s88
      %s89 = sphi 0, %s86
      %s90 = sphi 0, %s89
      %s106 = sphi 0, %s90
      %s112 = sphi 0, %s114
      %s115 = sphi 0, %s112
      %s116 = sphi 0, %s115
      %s132 = sphi 0, %s116
      %s138 = sphi 0, %s140
      %s141 = sphi 0, %s138
      %s142 = sphi 0, %s141
      %s158 = sphi 0, %s142
      %s164 = sphi 0, %s166
      %s167 = sphi 0, %s164
      %s168 = sphi 0, %s167
      %s184 = sphi 0, %s168
    $region4: #{tpu_custom_call.1} parent=1 // loop_header_branch
      %15 = sbr.rel (%p13) target = $region8
    $region5: #{tpu_custom_call.1} parent=1 // loop_body
      %s17 = ssub.s32 %s12, 1
      %s18 = ssub.s32 %s12, 2
      %s25 = sadd.s32 1, %s20
      %p26 = scmp.ge.s32.totalorder %s25, 1
      %s27 = scalar_select %p26, 0, %s25
      %s28 = sadd.s32 1, %s19
      %s29 = scalar_select %p26, %s28, %s19
      %p30 = scmp.ge.s32.totalorder %s29, 2
      %s31 = scalar_select %p30, 0, %s29
      %s32 = ssub.s32 %s19, %s31
      %p33 = scmp.eq.s32.totalorder %s32, 0
      %s35 = sadd.s32 %s34, 1
      %s36 = scalar_select %p33, %s34, %s35
      %p39 = pneg %p33
      %p40 = scmp.eq.s32.totalorder %s12, 1
      %p41 = por %p39, %p40
      %p42 = scmp.ne.s32.totalorder %s34, %s37
      %p43 = scmp.eq.s32.totalorder %s12, 0
      %p44 = por %p42, %p43
      %p45 = scmp.ne.s32.totalorder %s34, %s37
      %p46 = scmp.eq.s32.totalorder %s17, 1
      %p47 = por %p45, %p46
      %p48 = scmp.ne.s32.totalorder %s37, %s38
      %p49 = scmp.eq.s32.totalorder %s17, 0
      %p50 = por %p48, %p49
      %p51 = scmp.ne.s32.totalorder %s37, %s38
      %p52 = scmp.eq.s32.totalorder %s18, 1
      %p53 = por %p51, %p52
      %p55 = scmp.ne.s32.totalorder %s38, %s54
      %p56 = scmp.eq.s32.totalorder %s18, 0
      %p57 = por %p55, %p56
      %s58 = ssub.s32 %s19, %s31
      %p59 = scmp.eq.s32.totalorder %s58, 0
      %s61 = sadd.s32 %s60, 1
      %s62 = scalar_select %p59, %s60, %s61
      %p65 = pneg %p59
      %p66 = scmp.eq.s32.totalorder %s12, 1
      %p67 = por %p65, %p66
      %p68 = scmp.ne.s32.totalorder %s60, %s63
      %p69 = scmp.eq.s32.totalorder %s12, 0
      %p70 = por %p68, %p69
      %p71 = scmp.ne.s32.totalorder %s60, %s63
      %p72 = scmp.eq.s32.totalorder %s17, 1
      %p73 = por %p71, %p72
      %p74 = scmp.ne.s32.totalorder %s63, %s64
      %p75 = scmp.eq.s32.totalorder %s17, 0
      %p76 = por %p74, %p75
      %p77 = scmp.ne.s32.totalorder %s63, %s64
      %p78 = scmp.eq.s32.totalorder %s18, 1
      %p79 = por %p77, %p78
      %p81 = scmp.ne.s32.totalorder %s64, %s80
      %p82 = scmp.eq.s32.totalorder %s18, 0
      %p83 = por %p81, %p82
      %s84 = ssub.s32 %s20, %s27
      %p85 = scmp.eq.s32.totalorder %s84, 0
      %s87 = sadd.s32 %s86, 1
      %s88 = scalar_select %p85, %s86, %s87
      %p91 = pneg %p85
      %p92 = scmp.eq.s32.totalorder %s12, 1
      %p93 = por %p91, %p92
      %p94 = scmp.ne.s32.totalorder %s86, %s89
      %p95 = scmp.eq.s32.totalorder %s12, 0
      %p96 = por %p94, %p95
      %p97 = scmp.ne.s32.totalorder %s86, %s89
      %p98 = scmp.eq.s32.totalorder %s17, 1
      %p99 = por %p97, %p98
      %p100 = scmp.ne.s32.totalorder %s89, %s90
      %p101 = scmp.eq.s32.totalorder %s17, 0
      %p102 = por %p100, %p101
      %p103 = scmp.ne.s32.totalorder %s89, %s90
      %p104 = scmp.eq.s32.totalorder %s18, 1
      %p105 = por %p103, %p104
      %p107 = scmp.ne.s32.totalorder %s90, %s106
      %p108 = scmp.eq.s32.totalorder %s18, 0
      %p109 = por %p107, %p108
      %s110 = ssub.s32 %s20, %s27
      %p111 = scmp.eq.s32.totalorder %s110, 0
      %s113 = sadd.s32 %s112, 1
      %s114 = scalar_select %p111, %s112, %s113
      %p117 = pneg %p111
      %p118 = scmp.eq.s32.totalorder %s12, 1
      %p119 = por %p117, %p118
      %p120 = scmp.ne.s32.totalorder %s112, %s115
      %p121 = scmp.eq.s32.totalorder %s12, 0
      %p122 = por %p120, %p121
      %p123 = scmp.ne.s32.totalorder %s112, %s115
      %p124 = scmp.eq.s32.totalorder %s17, 1
      %p125 = por %p123, %p124
      %p126 = scmp.ne.s32.totalorder %s115, %s116
      %p127 = scmp.eq.s32.totalorder %s17, 0
      %p128 = por %p126, %p127
      %p129 = scmp.ne.s32.totalorder %s115, %s116
      %p130 = scmp.eq.s32.totalorder %s18, 1
      %p131 = por %p129, %p130
      %p133 = scmp.ne.s32.totalorder %s116, %s132
      %p134 = scmp.eq.s32.totalorder %s18, 0
      %p135 = por %p133, %p134
      %s136 = ssub.s32 %s20, %s27
      %p137 = scmp.eq.s32.totalorder %s136, 0
      %s139 = sadd.s32 %s138, 1
      %s140 = scalar_select %p137, %s138, %s139
      %p143 = pneg %p137
      %p144 = scmp.eq.s32.totalorder %s12, 1
      %p145 = por %p143, %p144
      %p146 = scmp.ne.s32.totalorder %s138, %s141
      %p147 = scmp.eq.s32.totalorder %s12, 0
      %p148 = por %p146, %p147
      %p149 = scmp.ne.s32.totalorder %s138, %s141
      %p150 = scmp.eq.s32.totalorder %s17, 1
      %p151 = por %p149, %p150
      %p152 = scmp.ne.s32.totalorder %s141, %s142
      %p153 = scmp.eq.s32.totalorder %s17, 0
      %p154 = por %p152, %p153
      %p155 = scmp.ne.s32.totalorder %s141, %s142
      %p156 = scmp.eq.s32.totalorder %s18, 1
      %p157 = por %p155, %p156
      %p159 = scmp.ne.s32.totalorder %s142, %s158
      %p160 = scmp.eq.s32.totalorder %s18, 0
      %p161 = por %p159, %p160
      %s162 = ssub.s32 %s19, %s31
      %p163 = scmp.eq.s32.totalorder %s162, 0
      %s165 = sadd.s32 %s164, 1
      %s166 = scalar_select %p163, %s164, %s165
      %p169 = pneg %p163
      %p170 = scmp.eq.s32.totalorder %s12, 1
      %p171 = por %p169, %p170
      %p172 = scmp.ne.s32.totalorder %s164, %s167
      %p173 = scmp.eq.s32.totalorder %s12, 0
      %p174 = por %p172, %p173
      %p175 = scmp.ne.s32.totalorder %s164, %s167
      %p176 = scmp.eq.s32.totalorder %s17, 1
      %p177 = por %p175, %p176
      %p178 = scmp.ne.s32.totalorder %s167, %s168
      %p179 = scmp.eq.s32.totalorder %s17, 0
      %p180 = por %p178, %p179
      %p181 = scmp.ne.s32.totalorder %s167, %s168
      %p182 = scmp.eq.s32.totalorder %s18, 1
      %p183 = por %p181, %p182
      %p185 = scmp.ne.s32.totalorder %s168, %s184
      %p186 = scmp.eq.s32.totalorder %s18, 0
      %p187 = por %p185, %p186
      %p188 = scmp.le.s32.totalorder 1, %s12
      %p189 = scmp.lt.s32.totalorder %s12, 3
      %p190 = pnand %p188, %p189
      %p191 = pneg %p190
      // Predicated region
      $region9: #{tpu_custom_call.1} parent=5 // pred_check
        _
      $region10: #{tpu_custom_call.1} parent=5 // pred_check_branch
        %193 = sbr.rel (%p190) target = $region12
      $region11: #{tpu_custom_call.1} parent=5 // pred_region
        %s194 = ssub.s32 %s12, 1
        // Predicated region
        $region13: #{tpu_custom_call.1} parent=11 // pred_check
          %p195 = pneg %p102
        $region14: #{tpu_custom_call.1} parent=11 // pred_check_branch
          %197 = sbr.rel (%p195) target = $region16
        $region15: #{tpu_custom_call.1} parent=11 // pred_region
          %s198 = smul.u32 16, %s22
          %200 = vsyncadd [#allocation8], 0
          %s201 = smul.addr %s198, 8
          %s202 = scalar_lea.hbm %s2, %s201
          %s203 = sshll.u32 %s202, 4
          %s204 = int_to_ptr.hbm [resolvable:$true] %s203
          %s205 = sshll.u32 [#allocation7], 4
          %s206 = int_to_ptr.vmem [resolvable:$true] %s205
          %211 = dma.hbm_to_vmem [thread:$0]  %s204, 2048, %s206, [#allocation8], 128, 128, 8
        $region16: #{tpu_custom_call.1} parent=11 // pred_fallthru
          _
        // Predicated region
        $region17: #{tpu_custom_call.1} parent=11 // pred_check
          %p212 = pneg %p128
        $region18: #{tpu_custom_call.1} parent=11 // pred_check_branch
          %214 = sbr.rel (%p212) target = $region20
        $region19: #{tpu_custom_call.1} parent=11 // pred_region
          %p215 = scmp.lt.s32.totalorder %s22, 0
          %s216 = scalar_select %p215, %s22, 0
          %s217 = scalar_lea.vmem %s3, %s216
        $region20: #{tpu_custom_call.1} parent=11 // pred_fallthru
          _
        // Predicated region
        $region21: #{tpu_custom_call.1} parent=11 // pred_check
          %p218 = pneg %p154
        $region22: #{tpu_custom_call.1} parent=11 // pred_check_branch
          %220 = sbr.rel (%p218) target = $region24
        $region23: #{tpu_custom_call.1} parent=11 // pred_region
          %p221 = scmp.lt.s32.totalorder %s22, 0
          %s222 = scalar_select %p221, %s22, 0
          %s223 = scalar_lea.vmem %s4, %s222
        $region24: #{tpu_custom_call.1} parent=11 // pred_fallthru
          _
      $region12: #{tpu_custom_call.1} parent=5 // pred_fallthru
        _
      %p224 = scmp.lt.s32.totalorder %s12, 2
      // Predicated region
      $region25: #{tpu_custom_call.1} parent=5 // pred_check
        %p225 = pneg %p224
      $region26: #{tpu_custom_call.1} parent=5 // pred_check_branch
        %227 = sbr.rel (%p225) target = $region28
      $region27: #{tpu_custom_call.1} parent=5 // pred_region
        // Predicated region
        $region29: #{tpu_custom_call.1} parent=27 // pred_check
          %p228 = pneg %p44
        $region30: #{tpu_custom_call.1} parent=27 // pred_check_branch
          %230 = sbr.rel (%p228) target = $region32
        $region31: #{tpu_custom_call.1} parent=27 // pred_region
          %p231 = scmp.lt.s32.totalorder %s19, 1
          %s232 = scalar_select %p231, %s19, 1
          %s233 = smul.addr %s232, 8
          %s234 = scalar_lea.vmem %s0, %s233
        $region32: #{tpu_custom_call.1} parent=27 // pred_fallthru
          _
        // Predicated region
        $region33: #{tpu_custom_call.1} parent=27 // pred_check
          %p235 = pneg %p70
        $region34: #{tpu_custom_call.1} parent=27 // pred_check_branch
          %237 = sbr.rel (%p235) target = $region36
        $region35: #{tpu_custom_call.1} parent=27 // pred_region
          %p238 = scmp.lt.s32.totalorder %s19, 1
          %s239 = scalar_select %p238, %s19, 1
          %s240 = smul.addr %s239, 8
          %s241 = scalar_lea.vmem %s1, %s240
        $region36: #{tpu_custom_call.1} parent=27 // pred_fallthru
          _
      $region28: #{tpu_custom_call.1} parent=5 // pred_fallthru
        _
      %p242 = scmp.le.s32.totalorder 1, %s12
      %p243 = scmp.lt.s32.totalorder %s12, 3
      %p244 = pnand %p242, %p243
      %p245 = pneg %p244
      // Predicated region
      $region37: #{tpu_custom_call.1} parent=5 // pred_check
        _
      $region38: #{tpu_custom_call.1} parent=5 // pred_check_branch
        %247 = sbr.rel (%p244) target = $region40
      $region39: #{tpu_custom_call.1} parent=5 // pred_region
        %s248 = ssub.s32 %s12, 1
        // Predicated region
        $region41: #{tpu_custom_call.1} parent=39 // pred_check
          %p249 = pneg %p102
        $region42: #{tpu_custom_call.1} parent=39 // pred_check_branch
          %251 = sbr.rel (%p249) target = $region44
        $region43: #{tpu_custom_call.1} parent=39 // pred_region
          %253 = dma.done [#allocation8], 2048
        $region44: #{tpu_custom_call.1} parent=39 // pred_fallthru
          _
        %p254 = scmp.lt.s32.totalorder %s21, 1
        %s255 = scalar_select %p254, %s21, 1
        %s256 = smul.addr %s255, 8
        %s257 = scalar_lea.vmem %s0, %s256
        %p258 = pneg %p50
        %p259 = pneg %p47
        %p260 = scmp.lt.s32.totalorder %s21, 1
        %s261 = scalar_select %p260, %s21, 1
        %s262 = smul.addr %s261, 8
        %s263 = scalar_lea.vmem %s1, %s262
        %p264 = pneg %p76
        %p265 = pneg %p73
        %p266 = pneg %p102
        %p267 = pneg %p99
        %p268 = scmp.lt.s32.totalorder %s22, 0
        %s269 = scalar_select %p268, %s22, 0
        %s270 = scalar_lea.vmem %s3, %s269
        %p271 = pneg %p128
        %p272 = pneg %p125
        %p273 = scmp.lt.s32.totalorder %s22, 0
        %s274 = scalar_select %p273, %s22, 0
        %s275 = scalar_lea.vmem %s4, %s274
        %p276 = pneg %p154
        %p277 = pneg %p151
        %p278 = pneg %p180
        %p279 = pneg %p177
        %p280 = scmp.lt.s32.totalorder %s21, 1
        %s281 = scalar_select %p280, %s21, 1
        %s282 = smul.addr %s281, 8
        %s283 = scalar_lea.vmem %s5, %s282
        %p284 = scmp.lt.s32.totalorder %s21, 1
        %s285 = scalar_select %p284, %s21, 1
        %s286 = smul.addr %s285, 8
        %s287 = scalar_lea.vmem %s0, %s286
        %p288 = scmp.lt.s32.totalorder %s21, 1
        %s289 = scalar_select %p288, %s21, 1
        %s290 = smul.addr %s289, 8
        %s291 = scalar_lea.vmem %s1, %s290
        %s292 = smul.u32 16, %s22
        %p293 = scmp.lt.s32.totalorder %s22, 0
        %s294 = scalar_select %p293, %s22, 0
        %s295 = scalar_lea.vmem %s3, %s294
        %p296 = scmp.lt.s32.totalorder %s22, 0
        %s297 = scalar_select %p296, %s22, 0
        %s298 = scalar_lea.vmem %s4, %s297
        %p299 = scmp.lt.s32.totalorder %s21, 1
        %s300 = scalar_select %p299, %s21, 1
        %s301 = smul.addr %s300, 8
        %s302 = scalar_lea.vmem %s5, %s301
        %p303 = scmp.eq.s32.totalorder %s22, 0
        // Predicated region
        $region45: #{tpu_custom_call.1} parent=39 // pred_check
          %p304 = pneg %p303
        $region46: #{tpu_custom_call.1} parent=39 // pred_check_branch
          %306 = sbr.rel (%p304) target = $region48
        $region47: #{tpu_custom_call.1} parent=39 // pred_region
          %v307 = vlaneseq
          %v308 = vshrl.u32 %v307, 7
          %v309 = vlaneseq
          %v310 = vand.u32 %v309, 127
          %v311 = vsub.s32 %v308, %v310
          %312 = vst [vmem:[#allocation2] sm:$0xff] %v311
          %vm313 = vcmask 7168
          %314 = vst.msk [vmem:[#allocation3] sm:$0xff] %vm313, -1e+30
          %315 = vst.msk [vmem:[#allocation4] sm:$0xff] %vm313, 0.0
          %316 = vst.msk [vmem:[#allocation5] sm:$0xff] %vm313, 0.0
          %317 = vst.msk [vmem:[#allocation6] sm:$0xff] %vm313, 0.0
        $region48: #{tpu_custom_call.1} parent=39 // pred_fallthru
          _
        %v318 = vld [vmem:[%s287] sm:$0xff]
        %v319 = vld [vmem:[#allocation7] sm:$0xff]
        %v320 = vld [vmem:[#allocation7 + $0x8] sm:$0xff]
        %v321 = vld [vmem:[#allocation7 + $0x10] sm:$0xff]
        %v322 = vld [vmem:[#allocation7 + $0x18] sm:$0xff]
        %v323 = vld [vmem:[#allocation7 + $0x20] sm:$0xff]
        %v324 = vld [vmem:[#allocation7 + $0x28] sm:$0xff]
        %v325 = vld [vmem:[#allocation7 + $0x30] sm:$0xff]
        %v326 = vld [vmem:[#allocation7 + $0x38] sm:$0xff]
        %v327 = vld [vmem:[#allocation7 + $0x40] sm:$0xff]
        %v328 = vld [vmem:[#allocation7 + $0x48] sm:$0xff]
        %v329 = vld [vmem:[#allocation7 + $0x50] sm:$0xff]
        %v330 = vld [vmem:[#allocation7 + $0x58] sm:$0xff]
        %v331 = vld [vmem:[#allocation7 + $0x60] sm:$0xff]
        %v332 = vld [vmem:[#allocation7 + $0x68] sm:$0xff]
        %v333 = vld [vmem:[#allocation7 + $0x70] sm:$0xff]
        %v334 = vld [vmem:[#allocation7 + $0x78] sm:$0xff]
        %v335 = vld [vmem:[%s298] sm:$0x1]
        %v337 = vperm.slane %v335, 0
        %339 = vmatpush.xpose.msra.mxu0 %v334
        %340 = vmatpush.xpose.msra.mxu0 %v333
        %341 = vmatpush.xpose.msra.mxu0 %v332
        %342 = vmatpush.xpose.msra.mxu0 %v331
        %343 = vmatpush.xpose.msra.mxu0 %v330
        %344 = vmatpush.xpose.msra.mxu0 %v329
        %345 = vmatpush.xpose.msra.mxu0 %v328
        %346 = vmatpush.xpose.msra.mxu0 %v327
        %347 = vmatpush.xpose.msra.mxu0 %v326
        %348 = vmatpush.xpose.msra.mxu0 %v325
        %349 = vmatpush.xpose.msra.mxu0 %v324
        %350 = vmatpush.xpose.msra.mxu0 %v323
        %351 = vmatpush.xpose.msra.mxu0 %v322
        %352 = vmatpush.xpose.msra.mxu0 %v321
        %353 = vmatpush.xpose.msra.mxu0 %v320
        %354 = vmatpush.xpose.msra.mxu0 %v319
        %355 = vmatmul.f32.gmra.mxu0 %v318
        %v356 = vpop.f32.mrf.mxu0
        %v357 = vadd.f32 %v337, %v356
        %358 = vdwg.mxu0
        %v359 = vld [vmem:[#allocation2] sm:$0xff]
        %s360 = smul.u32 %s22, 128
        %s361 = smul.u32 %s21, 8
        %s362 = ssub.s32 %s360, %s361
        %v363 = vstv %s362
        %vm364 = vcmp.ne.s32.totalorder %v359, %v363
        %v365 = vsel %vm364, %v357, -1e+30
        %v366 = vld [vmem:[#allocation3] sm:$0xff]
        %367 = vmax.xlane.f32.xlu0 %v365
        %v368 = vpop.xlane.xlu0 %367
        %v369 = vmax.f32 %v366, %v368
        %v370 = vsub.f32 %v366, %v369
        %v371 = vmul.f32 %v370, 1.442695
        %v372 = vpow.pop %v371
        %374 = vset.pattern.permute.xlu0 0
        %375 = vperm.xlu0 %374, %v369
        %v376 = vpop.permute.xlu0 %375
        %v378 = vsub.f32 %v365, %v376
        %v379 = vmul.f32 %v378, 1.442695
        %v380 = vpow.pop %v379
        %v381 = vld [vmem:[#allocation4] sm:$0xff]
        %v382 = vmul.f32 %v381, %v372
        %383 = vadd.xlane.f32.xlu0 %v380
        %v384 = vpop.xlane.xlu0 %383
        %v385 = vadd.f32 %v382, %v384
        %vm386 = vcmask 7168
        %387 = vst.msk [vmem:[#allocation4] sm:$0xff] %vm386, %v385
        %v388 = vld [vmem:[%s291] sm:$0xff]
        %v389 = vld [vmem:[%s295] sm:$0x1]
        %390 = vset.pattern.permute.xlu0 0
        %391 = vperm.xlu0 %390, %v388
        %v392 = vpop.permute.xlu0 %391
        %v393 = vperm.slane %v389, 0
        %vm394 = vcmp.eq.s32.totalorder %v392, %v393
        %vm395 = vmand %vm394, %vm364
        %v396 = vld [vmem:[#allocation5] sm:$0xff]
        %v397 = vsel %vm395, %v365, 0.0
        %398 = vadd.xlane.f32.xlu0 %v397
        %v399 = vpop.xlane.xlu0 %398
        %v400 = vadd.f32 %v396, %v399
        %401 = vst.msk [vmem:[#allocation5] sm:$0xff] %vm386, %v400
        %v402 = vld [vmem:[#allocation6] sm:$0xff]
        %v403 = vsel %vm395, 1.0, 0.0
        %404 = vadd.xlane.f32.xlu0 %v403
        %v405 = vpop.xlane.xlu0 %404
        %v406 = vadd.f32 %v402, %v405
        %407 = vst.msk [vmem:[#allocation6] sm:$0xff] %vm386, %v406
        %408 = vst.msk [vmem:[#allocation3] sm:$0xff] %vm386, %v369
        // Predicated region
        $region49: #{tpu_custom_call.1} parent=39 // pred_check
          %p409 = pneg %p303
        $region50: #{tpu_custom_call.1} parent=39 // pred_check_branch
          %411 = sbr.rel (%p409) target = $region52
        $region51: #{tpu_custom_call.1} parent=39 // pred_region
          %v412 = vld [vmem:[#allocation6] sm:$0xff]
          %v413 = vld [vmem:[#allocation4] sm:$0xff]
          %v414 = vlog2.pop %v413
          %v415 = vmul.f32 %v414, 0.6931472
          %v416 = vld [vmem:[#allocation3] sm:$0xff]
          %v417 = vadd.f32 %v415, %v416
          %v418 = vld [vmem:[#allocation5] sm:$0xff]
          %v419 = vmul.f32 %v412, %v417
          %v420 = vsub.f32 %v418, %v419
          %v421 = vrcp.pop %v412
          %v422 = vmul.f32 %v412, %v421
          %v423 = vsub.f32 1.0, %v422
          %v424 = vmul.f32 %v421, %v423
          %v425 = vadd.f32 %v421, %v424
          %vm426 = vweird.f32 %v412
          %vm427 = vweird.f32 %v421
          %vm428 = vmor %vm426, %vm427
          %v429 = vsel %vm428, %v421, %v425
          %v430 = vand.u32 2147483647, %v412
          %vm431 = vcmp.eq.f32.partialorder %v430, 8.507059e+37
          %v432 = vand.u32 %v412, 2147483648
          %v433 = vor.u32 1.1754944e-38, %v432
          %v434 = vsel %vm431, %v433, %v429
          %v435 = vmul.f32 %v420, %v434
          %v436 = vmul.f32 %v435, -1.0
          %v437 = vlaneseq
          %v438 = vshrl.u32 %v437, 7
          %v439 = vstv %s361
          %v440 = vadd.s32 %v439, %v438
          %vm441 = vcmp.lt.s32.totalorder %v440, 16
          %v442 = vsel %vm441, %v436, 0.0
          %443 = vst.msk [vmem:[%s302] sm:$0xff] %vm386, %v442
        $region52: #{tpu_custom_call.1} parent=39 // pred_fallthru
          _
        %p444 = scmp.lt.s32.totalorder %s21, 1
        %s445 = scalar_select %p444, %s21, 1
        %s446 = smul.addr %s445, 8
        %s447 = scalar_lea.vmem %s5, %s446
        // Predicated region
        $region53: #{tpu_custom_call.1} parent=39 // pred_check
          %p448 = pneg %p177
        $region54: #{tpu_custom_call.1} parent=39 // pred_check_branch
          %450 = sbr.rel (%p448) target = $region56
        $region55: #{tpu_custom_call.1} parent=39 // pred_region
          _
        $region56: #{tpu_custom_call.1} parent=39 // pred_fallthru
          _
      $region40: #{tpu_custom_call.1} parent=5 // pred_fallthru
        _
      %p451 = scmp.le.s32.totalorder 2, %s12
      // Predicated region
      $region57: #{tpu_custom_call.1} parent=5 // pred_check
        %p452 = pneg %p451
      $region58: #{tpu_custom_call.1} parent=5 // pred_check_branch
        %454 = sbr.rel (%p452) target = $region60
      $region59: #{tpu_custom_call.1} parent=5 // pred_region
        %s455 = ssub.s32 %s12, 2
        // Predicated region
        $region61: #{tpu_custom_call.1} parent=59 // pred_check
          %p456 = pneg %p183
        $region62: #{tpu_custom_call.1} parent=59 // pred_check_branch
          %458 = sbr.rel (%p456) target = $region64
        $region63: #{tpu_custom_call.1} parent=59 // pred_region
          %p459 = scmp.lt.s32.totalorder %s23, 1
          %s460 = scalar_select %p459, %s23, 1
          %s461 = smul.addr %s460, 8
          %s462 = scalar_lea.vmem %s5, %s461
        $region64: #{tpu_custom_call.1} parent=59 // pred_fallthru
          _
      $region60: #{tpu_custom_call.1} parent=5 // pred_fallthru
        _
    $region6: #{tpu_custom_call.1} parent=1 // loop_footer
      %s16 = sadd.s32 1, %s12
    $region7: #{tpu_custom_call.1} parent=1 // loop_footer_branch
      %11 = sbr.rel target = $region3
    $region8: #{tpu_custom_call.1} parent=1 // loop_exit
      _
    %463 = vsyncpa [#allocation8], 1
    %s464 = scalar_lea.sflag [#allocation8], 1
    %465 = vsyncpa %s464, 1

</llo_original>
